<compile_context>
chip_gen: v6e
topology: v6e:2x2x1
jax: 0.10.0
libtpu: 0.0.40
codegen_flags: <defaults>
</compile_context>

<pallas_src>
import numpy as np
import jax
import jax.numpy as jnp
from jax.experimental import pallas as pl
from jax.experimental.pallas import tpu as pltpu


def make_position_encoding_table(d_model: int, max_seq_len: int) -> np.ndarray:
    """Deterministic parameter setup, identical to the PyTorch __init__.

    Returns the full (max_seq_len + 1, d_model) table (row 0 = zero padding
    row) as float64 numpy, exactly like the nn.Embedding weight.
    """
    pe = np.array(
        [
            [pos / np.power(10000, 2.0 * (i // 2) / d_model) for i in range(d_model)]
            for pos in range(max_seq_len)
        ]
    )
    pe[:, 0::2] = np.sin(pe[:, 0::2])
    pe[:, 1::2] = np.cos(pe[:, 1::2])
    padding_row = np.zeros((1, d_model))
    return np.concatenate([padding_row, pe], axis=0)  # (max_seq_len + 1, d_model)


def _round_up(x: int, m: int) -> int:
    return ((x + m - 1) // m) * m


def _pos_enc_kernel(lens_ref, pe_ref, out_ref):
    """One grid step = BT batch rows x one sequence tile.

    lens_ref : SMEM (num_b_tiles * BT,) int32, scalar-prefetched lengths.
    pe_ref   : VMEM (TILE_L, d_model) float32 — encodings for positions
               li*TILE_L .. li*TILE_L + TILE_L - 1.
    out_ref  : VMEM (BT, TILE_L, d_model) float32 — output slab.
    """
    bi = pl.program_id(0)
    li = pl.program_id(1)
    tile_l = pe_ref.shape[0]
    bt = out_ref.shape[0]

    # Global position index, built only over the sublane axis; the where()
    # below broadcasts it across the d_model lanes (cheap on the VPU).
    j = jax.lax.broadcasted_iota(jnp.int32, (tile_l, 1), 0) + li * tile_l
    pe = pe_ref[...]

    # bt is a small static Python int -> unrolled masked stores.
    for r in range(bt):
        length = lens_ref[bi * bt + r]
        out_ref[r] = jnp.where(j < length, pe, 0.0)


def positional_encoding_forward(
    input_len: jnp.ndarray,
    pe_rows: jnp.ndarray,
    *,
    seq_tile_cap: int = 1024,
    vmem_budget_bytes: int = 24 * 1024 * 1024,
) -> jnp.ndarray:
    """input_len: [B, 1] int.  pe_rows: (max_seq_len, d_model) float32
    (sinusoid rows for positions 0..max_seq_len-1, i.e. the embedding table
    WITHOUT its leading zero padding row)."""
    lens = input_len.reshape(-1).astype(jnp.int32)  # (B,)
    B = lens.shape[0]
    max_seq_len, d_model = pe_rows.shape

    # Data-dependent output length -> resolved to a Python int (mirrors
    # torch.max(input_len) driving the output shape).
    # TODO(synk): this host sync forces eager execution & one compile per
    # distinct max_len; bucket max_len to a multiple of the seq tile if this
    # wrapper ever sits on a latency-critical path.
    max_len = int(jax.device_get(jnp.max(lens)))
    max_len = max(max_len, 1)  # guard degenerate all-zero lengths

    row_bytes = d_model * 4  # float32

    # --- sequence tile: multiple of 8 sublanes, bounded by the VMEM budget
    # (2x double-buffered input tile + 2x double-buffered output tile).
    max_tile_rows = max(8, ((vmem_budget_bytes // (4 * row_bytes)) // 8) * 8)
    tile_l = min(seq_tile_cap, _round_up(max_len, 8), max_tile_rows)
    tile_l = max(8, tile_l)
    num_seq_tiles = pl.cdiv(max_len, tile_l)

    # --- batch tile: pack several batch rows per step when the grid would be
    # tiny, to amortize the ~0.35us/step overhead.
    bt = 1
    if B * num_seq_tiles < 8:
        bt = min(B, 8)
        while bt > 1 and 2 * (1 + bt) * tile_l * row_bytes > vmem_budget_bytes:
            bt -= 1
    num_b_tiles = pl.cdiv(B, bt)

    # Pad lens so in-kernel SMEM scalar reads never go out of bounds when bt
    # does not divide B (padded rows map to output blocks that are clipped).
    if num_b_tiles * bt != B:
        lens = jnp.pad(lens, (0, num_b_tiles * bt - B))

    out = pl.pallas_call(
        _pos_enc_kernel,
        out_shape=jax.ShapeDtypeStruct((B, max_len, d_model), pe_rows.dtype),
        grid_spec=pltpu.PrefetchScalarGridSpec(
            num_scalar_prefetch=1,
            grid=(num_b_tiles, num_seq_tiles),
            in_specs=[
                # one sequence tile of the PE rows, shared by all batch rows
                pl.BlockSpec((tile_l, d_model), lambda bi, li, lens_ref: (li, 0)),
            ],
            out_specs=pl.BlockSpec(
                (bt, tile_l, d_model), lambda bi, li, lens_ref: (bi, li, 0)
            ),
        ),
        compiler_params=pltpu.CompilerParams(
            dimension_semantics=("parallel", "parallel"),
            vmem_limit_bytes=32 * 1024 * 1024,
        ),
    )(lens, pe_rows)
    return out


def _reference(input_len: np.ndarray, table: np.ndarray) -> np.ndarray:
    """Pure-numpy replica of the PyTorch forward (embedding-of-input_pos)."""
    lens = input_len.reshape(-1)
    max_len = int(lens.max())
    pos = np.stack(
        [
            np.array(list(range(1, l + 1)) + [0] * (max_len - l), dtype=np.int64)
            for l in lens
        ]
    )
    return table[pos]


if __name__ == "__main__":
    d_model = 32
    max_seq_len = 16
    batch = 4

    # Full table (with padding row) exactly as in the PyTorch module; the
    # kernel consumes the rows without the padding row (host-side slice, once).
    table = make_position_encoding_table(d_model, max_seq_len)
    pe_rows = jnp.asarray(table[1:], dtype=jnp.float32)  # (max_seq_len, d_model)

    key = jax.random.PRNGKey(0)
    input_len = jax.random.randint(key, (batch, 1), 1, max_seq_len + 1).astype(jnp.int32)

    out = positional_encoding_forward(input_len, pe_rows)
    out = jax.block_until_ready(out)

    ref = _reference(np.asarray(input_len), table).astype(np.float32)
    np.testing.assert_allclose(np.asarray(out), ref, rtol=1e-6, atol=1e-6)

    print("KERNEL_OK")
</pallas_src>

<mosaic_0001>
module attributes {stable_mosaic.version = 11 : i64} {
  func.func @_pos_enc_kernel(%arg0: i32, %arg1: i32, %arg2: memref<4xi32, #tpu.memory_space<smem>>, %arg3: memref<16x32xf32, #tpu.memory_space<vmem>>, %arg4: memref<4x16x32xf32, #tpu.memory_space<vmem>>) attributes {dimension_semantics = [#tpu.dimension_semantics<parallel>, #tpu.dimension_semantics<parallel>], iteration_bounds = array<i64: 1, 1>, scalar_prefetch = 1 : i64, scratch_operands = 0 : i64, tpu.core_type = #tpu.core_type<tc>, window_params = [{transform_indices = @transform_0, window_bounds = array<i64: 16, 32>}, {transform_indices = @transform_1, window_bounds = array<i64: 4, 16, 32>}]} {
    %0 = tpu.iota {dimensions = array<i32: 0>} : vector<16x1xi32>
    %c16_i32 = arith.constant 16 : i32
    %1 = arith.muli %arg1, %c16_i32 : i32
    %2 = vector.broadcast %1 : i32 to vector<16x1xi32>
    %3 = arith.addi %0, %2 : vector<16x1xi32>
    %c0 = arith.constant 0 : index
    %c0_0 = arith.constant 0 : index
    %4 = vector.load %arg3[%c0, %c0_0] : memref<16x32xf32, #tpu.memory_space<vmem>>, vector<16x32xf32>
    %c4_i32 = arith.constant 4 : i32
    %5 = arith.muli %arg0, %c4_i32 : i32
    %c0_i32 = arith.constant 0 : i32
    %6 = arith.addi %5, %c0_i32 : i32
    %7 = arith.index_cast %6 : i32 to index
    %8 = memref.load %arg2[%7] : memref<4xi32, #tpu.memory_space<smem>>
    %9 = vector.broadcast %8 : i32 to vector<16x1xi32>
    %10 = arith.cmpi slt, %3, %9 : vector<16x1xi32>
    %cst = arith.constant 0.000000e+00 : f32
    %11 = vector.shape_cast %10 : vector<16x1xi1> to vector<16x1xi1>
    %12 = vector.broadcast %11 : vector<16x1xi1> to vector<16x32xi1>
    %13 = vector.broadcast %cst : f32 to vector<16x32xf32>
    %14 = arith.select %12, %4, %13 : vector<16x32xi1>, vector<16x32xf32>
    %c0_1 = arith.constant 0 : index
    %c0_2 = arith.constant 0 : index
    %c0_3 = arith.constant 0 : index
    %15 = vector.load %arg4[%c0_1, %c0_2, %c0_3] : memref<4x16x32xf32, #tpu.memory_space<vmem>>, vector<1x16x32xf32>
    %16 = vector.shape_cast %15 : vector<1x16x32xf32> to vector<16x32xf32>
    %17 = vector.shape_cast %14 : vector<16x32xf32> to vector<1x16x32xf32>
    tpu.vector_store %arg4[%c0_1, %c0_2, %c0_3], %17 {strides = array<i32>} : memref<4x16x32xf32, #tpu.memory_space<vmem>>, vector<1x16x32xf32>,
    %c4_i32_4 = arith.constant 4 : i32
    %18 = arith.muli %arg0, %c4_i32_4 : i32
    %c1_i32 = arith.constant 1 : i32
    %19 = arith.addi %18, %c1_i32 : i32
    %20 = arith.index_cast %19 : i32 to index
    %21 = memref.load %arg2[%20] : memref<4xi32, #tpu.memory_space<smem>>
    %22 = vector.broadcast %21 : i32 to vector<16x1xi32>
    %23 = arith.cmpi slt, %3, %22 : vector<16x1xi32>
    %cst_5 = arith.constant 0.000000e+00 : f32
    %24 = vector.shape_cast %23 : vector<16x1xi1> to vector<16x1xi1>
    %25 = vector.broadcast %24 : vector<16x1xi1> to vector<16x32xi1>
    %26 = vector.broadcast %cst_5 : f32 to vector<16x32xf32>
    %27 = arith.select %25, %4, %26 : vector<16x32xi1>, vector<16x32xf32>
    %c1 = arith.constant 1 : index
    %c0_6 = arith.constant 0 : index
    %c0_7 = arith.constant 0 : index
    %28 = vector.load %arg4[%c1, %c0_6, %c0_7] : memref<4x16x32xf32, #tpu.memory_space<vmem>>, vector<1x16x32xf32>
    %29 = vector.shape_cast %28 : vector<1x16x32xf32> to vector<16x32xf32>
    %30 = vector.shape_cast %27 : vector<16x32xf32> to vector<1x16x32xf32>
    tpu.vector_store %arg4[%c1, %c0_6, %c0_7], %30 {strides = array<i32>} : memref<4x16x32xf32, #tpu.memory_space<vmem>>, vector<1x16x32xf32>,
    %c4_i32_8 = arith.constant 4 : i32
    %31 = arith.muli %arg0, %c4_i32_8 : i32
    %c2_i32 = arith.constant 2 : i32
    %32 = arith.addi %31, %c2_i32 : i32
    %33 = arith.index_cast %32 : i32 to index
    %34 = memref.load %arg2[%33] : memref<4xi32, #tpu.memory_space<smem>>
    %35 = vector.broadcast %34 : i32 to vector<16x1xi32>
    %36 = arith.cmpi slt, %3, %35 : vector<16x1xi32>
    %cst_9 = arith.constant 0.000000e+00 : f32
    %37 = vector.shape_cast %36 : vector<16x1xi1> to vector<16x1xi1>
    %38 = vector.broadcast %37 : vector<16x1xi1> to vector<16x32xi1>
    %39 = vector.broadcast %cst_9 : f32 to vector<16x32xf32>
    %40 = arith.select %38, %4, %39 : vector<16x32xi1>, vector<16x32xf32>
    %c2 = arith.constant 2 : index
    %c0_10 = arith.constant 0 : index
    %c0_11 = arith.constant 0 : index
    %41 = vector.load %arg4[%c2, %c0_10, %c0_11] : memref<4x16x32xf32, #tpu.memory_space<vmem>>, vector<1x16x32xf32>
    %42 = vector.shape_cast %41 : vector<1x16x32xf32> to vector<16x32xf32>
    %43 = vector.shape_cast %40 : vector<16x32xf32> to vector<1x16x32xf32>
    tpu.vector_store %arg4[%c2, %c0_10, %c0_11], %43 {strides = array<i32>} : memref<4x16x32xf32, #tpu.memory_space<vmem>>, vector<1x16x32xf32>,
    %c4_i32_12 = arith.constant 4 : i32
    %44 = arith.muli %arg0, %c4_i32_12 : i32
    %c3_i32 = arith.constant 3 : i32
    %45 = arith.addi %44, %c3_i32 : i32
    %46 = arith.index_cast %45 : i32 to index
    %47 = memref.load %arg2[%46] : memref<4xi32, #tpu.memory_space<smem>>
    %48 = vector.broadcast %47 : i32 to vector<16x1xi32>
    %49 = arith.cmpi slt, %3, %48 : vector<16x1xi32>
    %cst_13 = arith.constant 0.000000e+00 : f32
    %50 = vector.shape_cast %49 : vector<16x1xi1> to vector<16x1xi1>
    %51 = vector.broadcast %50 : vector<16x1xi1> to vector<16x32xi1>
    %52 = vector.broadcast %cst_13 : f32 to vector<16x32xf32>
    %53 = arith.select %51, %4, %52 : vector<16x32xi1>, vector<16x32xf32>
    %c3 = arith.constant 3 : index
    %c0_14 = arith.constant 0 : index
    %c0_15 = arith.constant 0 : index
    %54 = vector.load %arg4[%c3, %c0_14, %c0_15] : memref<4x16x32xf32, #tpu.memory_space<vmem>>, vector<1x16x32xf32>
    %55 = vector.shape_cast %54 : vector<1x16x32xf32> to vector<16x32xf32>
    %56 = vector.shape_cast %53 : vector<16x32xf32> to vector<1x16x32xf32>
    tpu.vector_store %arg4[%c3, %c0_14, %c0_15], %56 {strides = array<i32>} : memref<4x16x32xf32, #tpu.memory_space<vmem>>, vector<1x16x32xf32>,
    return
  }
  func.func @transform_0(%arg0: i32, %arg1: i32, %arg2: memref<4xi32, #tpu.memory_space<smem>>) -> (i32, i32) {
    %c0_i32 = arith.constant 0 : i32
    %c0_i32_0 = arith.constant 0 : i32
    return %arg1, %c0_i32 : i32, i32
  }
  func.func @transform_1(%arg0: i32, %arg1: i32, %arg2: memref<4xi32, #tpu.memory_space<smem>>) -> (i32, i32, i32) {
    %c0_i32 = arith.constant 0 : i32
    %c0_i32_0 = arith.constant 0 : i32
    return %arg0, %arg1, %c0_i32 : i32, i32, i32
  }
}

</mosaic_0001>

<llo_original>
// kernel: tpu_custom_call.1
$region0: #{tpu_custom_call.1}
  #allocation0 [shape = 'u32[]', space=smem, size = 0x4, offset = 0x4, fixed_abs, tag = 'smem constant byte address 0x4 - core index']
  #allocation1 [shape = 'u32[144,128]{1,0:T(1,128)}', space=vmem, size = 0x12000, scoped, tag = 'internal scratch']
  #allocation2 [shape = 's32[1]{0}', space=sflag, size = 0x4, scoped, tag = 'scoped memory for tpu_custom_call.1']
  #allocation3 [shape = 'u8[512]{0}', space=smem, size = 0x200, scoped, tag = 'prefetched SMEM operand 0']
  %s0 = inlined_call_operand.hbm [shape: s32[4], index: 0, kind: input, shape index: {}]
  %s1 = inlined_call_operand.hbm [shape: f32[16,32], index: 1, kind: input, shape index: {}]
  %s2 = inlined_call_operand.vmem [shape: f32[4,14,32], index: 2, kind: output, shape index: {}]
  %s3 = sld [smem:[#allocation0]]
  $region18: #{tpu_custom_call.1} parent=0
    _
  %s5 = ssub.s32 1, %s3
  %s6 = scalar_select 0, %s5, %s3
  %8 = dma.hbm_to_smem %s0, 16, [#allocation3], [#allocation2]
  %9 = dma.done [#allocation2], 16
  %10 = sfence
  $region1: #{tpu_custom_call.1} parent=0
    #allocation4 [shape = 'u8[8192]{0}', space=vmem, size = 0x2000, scoped, tag = 'input window, operand 1, single buffered']
    #allocation5 [shape = 's32[1]{0}', space=sflag, size = 0x4, scoped, tag = 'scoped memory for tpu_custom_call.1']
    %11 = vsyncpa [#allocation5], 0
    // Predicated region
    $region2: #{tpu_custom_call.1} parent=1 // pred_check
      _
    $region3: #{tpu_custom_call.1} parent=1 // pred_check_branch
      %13 = sbr.rel (0) target = $region5
    $region4: #{tpu_custom_call.1} parent=1 // pred_region
      %s15 = ssub.s32 256, 256
      %16 = vsyncadd [#allocation5], %s15
      %s17 = sshll.u32 [#allocation4], 4
      %s18 = int_to_ptr.vmem [resolvable:$true] %s17
      %23 = dma.hbm_to_vmem [thread:$0]  %s1, 256, %s18, [#allocation5], 128, 128, 8
    $region5: #{tpu_custom_call.1} parent=1 // pred_fallthru
      _
    // Predicated region
    $region6: #{tpu_custom_call.1} parent=1 // pred_check
      _
    $region7: #{tpu_custom_call.1} parent=1 // pred_check_branch
      %25 = sbr.rel (0) target = $region9
    $region8: #{tpu_custom_call.1} parent=1 // pred_region
      %26 = dma.done [#allocation5], 256
    $region9: #{tpu_custom_call.1} parent=1 // pred_fallthru
      _
    %v27 = vlaneseq
    %v28 = vshrl.u32 %v27, 7
    %v29 = vadd.s32 %v28, 8
    %s30 = smul.u32 0, 16
    %v31 = vstv %s30
    %v32 = vadd.s32 %v28, %v31
    %v33 = vadd.s32 %v29, %v31
    %v34 = vld [vmem:[#allocation4] sm:$0xff]
    %v35 = vld [vmem:[#allocation4 + $0x8] sm:$0xff]
    %s36 = smul.u32 0, 4
    %s37 = sld [smem:[#allocation3 + %s36]]
    %v38 = vstv %s37
    %vm39 = vcmp.lt.s32.totalorder %v32, %v38
    %vm40 = vcmp.lt.s32.totalorder %v33, %v38
    %v41 = vsel %vm39, 1, 0
    %v42 = vsel %vm40, 1, 0
    %vm43 = vcmp.eq.s32.totalorder %v41, 1
    %vm44 = vcmp.eq.s32.totalorder %v42, 1
    %v45 = vsel %vm43, %v34, 0.0
    %v46 = vsel %vm44, %v35, 0.0
    %vm47 = vcmask 261120
    %48 = vst.msk [vmem:[%s2] sm:$0xff] %vm47, %v45
    %49 = vst.msk [vmem:[%s2 + $0x8] sm:$0xff] %vm47, %v46
    %s50 = sadd.s32 %s36, 1
    %s51 = sld [smem:[#allocation3 + %s50]]
    %v52 = vstv %s51
    %vm53 = vcmp.lt.s32.totalorder %v32, %v52
    %vm54 = vcmp.lt.s32.totalorder %v33, %v52
    %v55 = vsel %vm53, 1, 0
    %v56 = vsel %vm54, 1, 0
    %vm57 = vcmp.eq.s32.totalorder %v55, 1
    %vm58 = vcmp.eq.s32.totalorder %v56, 1
    %v59 = vsel %vm57, %v34, 0.0
    %v60 = vsel %vm58, %v35, 0.0
    %s61 = scalar_lea.vmem %s2, 16
    %62 = vst.msk [vmem:[%s61] sm:$0xff] %vm47, %v59
    %63 = vst.msk [vmem:[%s61 + $0x8] sm:$0xff] %vm47, %v60
    %s64 = sadd.s32 %s36, 2
    %s65 = sld [smem:[#allocation3 + %s64]]
    %v66 = vstv %s65
    %vm67 = vcmp.lt.s32.totalorder %v32, %v66
    %vm68 = vcmp.lt.s32.totalorder %v33, %v66
    %v69 = vsel %vm67, 1, 0
    %v70 = vsel %vm68, 1, 0
    %vm71 = vcmp.eq.s32.totalorder %v69, 1
    %vm72 = vcmp.eq.s32.totalorder %v70, 1
    %v73 = vsel %vm71, %v34, 0.0
    %v74 = vsel %vm72, %v35, 0.0
    %s75 = scalar_lea.vmem %s2, 32
    %76 = vst.msk [vmem:[%s75] sm:$0xff] %vm47, %v73
    %77 = vst.msk [vmem:[%s75 + $0x8] sm:$0xff] %vm47, %v74
    %s78 = sadd.s32 %s36, 3
    %s79 = sld [smem:[#allocation3 + %s78]]
    %v80 = vstv %s79
    %vm81 = vcmp.lt.s32.totalorder %v32, %v80
    %vm82 = vcmp.lt.s32.totalorder %v33, %v80
    %v83 = vsel %vm81, 1, 0
    %v84 = vsel %vm82, 1, 0
    %vm85 = vcmp.eq.s32.totalorder %v83, 1
    %vm86 = vcmp.eq.s32.totalorder %v84, 1
    %v87 = vsel %vm85, %v34, 0.0
    %v88 = vsel %vm86, %v35, 0.0
    %s89 = scalar_lea.vmem %s2, 48
    %90 = vst.msk [vmem:[%s89] sm:$0xff] %vm47, %v87
    %91 = vst.msk [vmem:[%s89 + $0x8] sm:$0xff] %vm47, %v88
    // Predicated region
    $region10: #{tpu_custom_call.1} parent=1 // pred_check
      _
    $region11: #{tpu_custom_call.1} parent=1 // pred_check_branch
      %93 = sbr.rel (0) target = $region13
    $region12: #{tpu_custom_call.1} parent=1 // pred_region
      _
    $region13: #{tpu_custom_call.1} parent=1 // pred_fallthru
      _
    // Predicated region
    $region14: #{tpu_custom_call.1} parent=1 // pred_check
      _
    $region15: #{tpu_custom_call.1} parent=1 // pred_check_branch
      %95 = sbr.rel (0) target = $region17
    $region16: #{tpu_custom_call.1} parent=1 // pred_region
      _
    $region17: #{tpu_custom_call.1} parent=1 // pred_fallthru
      _
    %96 = vsyncpa [#allocation5], 1

</llo_original>
